<compile_context>
chip_gen: v6e
topology: v6e:2x2x1
jax: 0.10.0
libtpu: 0.0.40
codegen_flags: <defaults>
</compile_context>

<pallas_src>
import functools

import jax
import jax.numpy as jnp
from jax.experimental import pallas as pl
from jax.experimental.pallas import tpu as pltpu


def _round_up(a, b):
    return (a + b - 1) // b * b


def mlp_kernel(x_ref, w1_ref, w2_ref, w3_ref, b_ref, o_ref, *, nh_pad, n_out):
    # x tile: (tb, n_inputs) f32 -> cast to bf16 feeding the MXU.
    xb = x_ref[...].astype(jnp.bfloat16)

    # Layer 1: Linear + ReLU  (bf16 matmul, f32 accumulation, f32 elementwise)
    h = jnp.dot(xb, w1_ref[...], preferred_element_type=jnp.float32)
    h = jnp.maximum(h + b_ref[0:1, 0:nh_pad], 0.0)

    # Layer 2: Linear + ReLU
    h = jnp.dot(h.astype(jnp.bfloat16), w2_ref[...],
                preferred_element_type=jnp.float32)
    h = jnp.maximum(h + b_ref[1:2, 0:nh_pad], 0.0)

    # Layer 3: Linear (no activation), narrow f32 store (n_out lanes).
    out = jnp.dot(h.astype(jnp.bfloat16), w3_ref[...],
                  preferred_element_type=jnp.float32)
    o_ref[...] = (out + b_ref[2:3, 0:n_out]).astype(o_ref.dtype)


def prepare_params(params):
    """One-time conversion of PyTorch-layout params (W [out,in], b [out]) to
    kernel-ready layout: transposed, hidden dims lane-padded to 128, bf16
    weights, packed f32 biases.  The output dim of w3 is left unpadded so the
    kernel's output store is exactly (tb, n_out)."""
    n_hid, n_in = params["w1"].shape
    n_out = params["w3"].shape[0]
    nh_pad = _round_up(n_hid, 128)
    bw = max(nh_pad, _round_up(n_out, 128))

    def pad_to(a, shape):
        return jnp.pad(a, [(0, s - d) for d, s in zip(a.shape, shape)])

    kparams = {
        "w1": pad_to(params["w1"].T, (n_in, nh_pad)).astype(jnp.bfloat16),
        "w2": pad_to(params["w2"].T, (nh_pad, nh_pad)).astype(jnp.bfloat16),
        "w3": pad_to(params["w3"].T, (nh_pad, n_out)).astype(jnp.bfloat16),
        "b": jnp.stack([pad_to(params["b1"], (bw,)),
                        pad_to(params["b2"], (bw,)),
                        pad_to(params["b3"], (bw,))]).astype(jnp.float32),
    }
    meta = {"n_inputs": n_in, "n_hiddens": n_hid, "n_outputs": n_out,
            "nh_pad": nh_pad}
    return kparams, meta


def net_forward(x, t, kparams, meta, *, min_pallas_batch=64):
    """Forward pass of Net (non-cifar / non-tiered branch).

    x: [batch, n_inputs] f32.  t: task id (unused in the MLP branch).
    kparams/meta: output of prepare_params (call once, reuse every forward).
    """
    del t  # task id is unused for the MLP branch
    batch, n_in = x.shape
    nh_pad = meta["nh_pad"]
    n_hid = meta["n_hiddens"]
    n_out = meta["n_outputs"]
    w1, w2, w3, b = kparams["w1"], kparams["w2"], kparams["w3"], kparams["b"]
    bw = b.shape[1]

    # Small-batch fast path: at the module's native scale (batch ~8) a single
    # XLA fusion beats the pallas_call launch + DMA overhead.
    if batch < min_pallas_batch:
        bf = jnp.bfloat16
        h = jnp.dot(x.astype(bf), w1,
                    preferred_element_type=jnp.float32) + b[0, :nh_pad]
        h = jnp.maximum(h, 0.0)
        h = jnp.dot(h.astype(bf), w2,
                    preferred_element_type=jnp.float32) + b[1, :nh_pad]
        h = jnp.maximum(h, 0.0)
        return jnp.dot(h.astype(bf), w3,
                       preferred_element_type=jnp.float32) + b[2, :n_out]

    # Batch tiling: cap 512 rows/tile; once the batch is big enough to split,
    # force >= 2 grid steps so the "parallel" axis can use both v7x TCs.
    cap = 512
    n_steps_min = 2 if batch > 256 else 1
    tb = min(cap, _round_up(pl.cdiv(batch, n_steps_min), 8))
    num_tiles = pl.cdiv(batch, tb)  # partial last block; no jnp.pad of x.

    kernel = functools.partial(mlp_kernel, nh_pad=nh_pad, n_out=n_out)

    flops = 2 * batch * (n_in * n_hid + n_hid * n_hid + n_hid * n_out)
    bytes_accessed = (x.size * 4 + w1.size * 2 + w2.size * 2 + w3.size * 2
                      + b.size * 4 + batch * n_out * 4)

    out = pl.pallas_call(
        kernel,
        out_shape=jax.ShapeDtypeStruct((batch, n_out), jnp.float32),
        grid=(num_tiles,),
        in_specs=[
            pl.BlockSpec((tb, n_in), lambda i: (i, 0)),        # x batch tile
            pl.BlockSpec((n_in, nh_pad), lambda i: (0, 0)),    # weights stay
            pl.BlockSpec((nh_pad, nh_pad), lambda i: (0, 0)),  # VMEM-resident
            pl.BlockSpec((nh_pad, n_out), lambda i: (0, 0)),   # across tiles
            pl.BlockSpec((3, bw), lambda i: (0, 0)),           # packed biases
        ],
        out_specs=pl.BlockSpec((tb, n_out), lambda i: (i, 0)),
        compiler_params=pltpu.CompilerParams(
            dimension_semantics=("parallel",)),
        cost_estimate=pl.CostEstimate(
            flops=flops, transcendentals=0, bytes_accessed=bytes_accessed),
    )(x, w1, w2, w3, b)

    return out


def init_params(key, n_inputs, n_hiddens, n_outputs):
    """Deterministic synthetic init (shapes match nn.Linear: W [out,in], b [out])."""
    ks = jax.random.split(key, 6)

    def lin(kw, kb, fan_in, fan_out):
        bound = 1.0 / jnp.sqrt(fan_in)
        w = jax.random.uniform(kw, (fan_out, fan_in), jnp.float32, -bound, bound)
        b = jax.random.uniform(kb, (fan_out,), jnp.float32, -bound, bound)
        return w, b

    w1, b1 = lin(ks[0], ks[1], n_inputs, n_hiddens)
    w2, b2 = lin(ks[2], ks[3], n_hiddens, n_hiddens)
    w3, b3 = lin(ks[4], ks[5], n_hiddens, n_outputs)
    return {"w1": w1, "b1": b1, "w2": w2, "b2": b2, "w3": w3, "b3": b3}


def reference_forward_f32(x, params):
    h = jnp.maximum(x @ params["w1"].T + params["b1"], 0.0)
    h = jnp.maximum(h @ params["w2"].T + params["b2"], 0.0)
    return h @ params["w3"].T + params["b3"]


def reference_forward_bf16(x, params):
    # Emulates the kernel's precision choice: bf16 matmul operands, f32 accum.
    bf = jnp.bfloat16
    h = jnp.dot(x.astype(bf), params["w1"].T.astype(bf),
                preferred_element_type=jnp.float32) + params["b1"]
    h = jnp.maximum(h, 0.0)
    h = jnp.dot(h.astype(bf), params["w2"].T.astype(bf),
                preferred_element_type=jnp.float32) + params["b2"]
    h = jnp.maximum(h, 0.0)
    return jnp.dot(h.astype(bf), params["w3"].T.astype(bf),
                   preferred_element_type=jnp.float32) + params["b3"]


if __name__ == "__main__":
    # Small shapes implied by the module: n_layers=2, n_hiddens=32.
    n_inputs, n_hiddens, n_outputs = 32, 32, 16
    key = jax.random.PRNGKey(0)
    kx, kp, kx2 = jax.random.split(key, 3)
    params = init_params(kp, n_inputs, n_hiddens, n_outputs)
    kparams, meta = prepare_params(params)  # one-time layout/bf16 conversion
    t = 0  # task id, unused in the MLP branch

    def check(out, x, tight=5e-3, loose=1e-1):
        ref_b = reference_forward_bf16(x, params)
        ref_f = reference_forward_f32(x, params)
        assert jnp.allclose(out, ref_b, atol=tight, rtol=tight), (
            float(jnp.max(jnp.abs(out - ref_b))))
        assert jnp.allclose(out, ref_f, atol=loose, rtol=loose), (
            float(jnp.max(jnp.abs(out - ref_f))))

    # 1) Module-native small batch, forced through the Pallas kernel.
    x_small = jax.random.normal(kx, (8, n_inputs), jnp.float32)
    out_small = jax.block_until_ready(
        net_forward(x_small, t, kparams, meta, min_pallas_batch=0))
    assert out_small.shape == (8, n_outputs)
    check(out_small, x_small)

    # The XLA small-batch fast path must agree with the kernel.
    out_fast = jax.block_until_ready(net_forward(x_small, t, kparams, meta))
    assert jnp.allclose(out_small, out_fast, atol=5e-3, rtol=5e-3)

    # 2) Larger, non-tile-aligned batch: exercises >=2 grid steps and the
    #    partial last block (no pre-pad of x, no post-kernel slice).
    x_big = jax.random.normal(kx2, (300, n_inputs), jnp.float32)
    out_big = jax.block_until_ready(net_forward(x_big, t, kparams, meta))
    assert out_big.shape == (300, n_outputs)
    check(out_big, x_big)

    print("KERNEL_OK")
</pallas_src>

<mosaic_0001>
module attributes {stable_mosaic.version = 11 : i64} {
  func.func @mlp_kernel(%arg0: i32, %arg1: memref<8x32xf32, #tpu.memory_space<vmem>>, %arg2: memref<32x128xbf16, #tpu.memory_space<vmem>>, %arg3: memref<128x128xbf16, #tpu.memory_space<vmem>>, %arg4: memref<128x16xbf16, #tpu.memory_space<vmem>>, %arg5: memref<3x128xf32, #tpu.memory_space<vmem>>, %arg6: memref<8x16xf32, #tpu.memory_space<vmem>>) attributes {dimension_semantics = [#tpu.dimension_semantics<parallel>], iteration_bounds = array<i64: 1>, scalar_prefetch = 0 : i64, scratch_operands = 0 : i64, tpu.core_type = #tpu.core_type<tc>, window_params = [{transform_indices = @transform_0, window_bounds = array<i64: 8, 32>}, {pipeline_mode = #tpu.pipeline_mode<synchronous>, transform_indices = @transform_1, window_bounds = array<i64: 32, 128>}, {pipeline_mode = #tpu.pipeline_mode<synchronous>, transform_indices = @transform_2, window_bounds = array<i64: 128, 128>}, {pipeline_mode = #tpu.pipeline_mode<synchronous>, transform_indices = @transform_3, window_bounds = array<i64: 128, 16>}, {pipeline_mode = #tpu.pipeline_mode<synchronous>, transform_indices = @transform_4, window_bounds = array<i64: 3, 128>}, {transform_indices = @transform_5, window_bounds = array<i64: 8, 16>}]} {
    %c0 = arith.constant 0 : index
    %c0_0 = arith.constant 0 : index
    %0 = vector.load %arg1[%c0, %c0_0] : memref<8x32xf32, #tpu.memory_space<vmem>>, vector<8x32xf32>
    %1 = arith.truncf %0 : vector<8x32xf32> to vector<8x32xbf16>
    %c0_1 = arith.constant 0 : index
    %c0_2 = arith.constant 0 : index
    %2 = vector.load %arg2[%c0_1, %c0_2] : memref<32x128xbf16, #tpu.memory_space<vmem>>, vector<32x128xbf16>
    %cst = arith.constant dense<0.000000e+00> : vector<8x128xf32>
    %3 = tpu.matmul %1, %2, %cst {dimension_numbers = #tpu.dot_dimension_numbers<[1], [0], [0], [1], [0, 0, 1, 1], [], []>} : vector<8x32xbf16>, vector<32x128xbf16>, vector<8x128xf32> -> vector<8x128xf32>
    %c0_3 = arith.constant 0 : index
    %c0_4 = arith.constant 0 : index
    %4 = vector.load %arg5[%c0_3, %c0_4] : memref<3x128xf32, #tpu.memory_space<vmem>>, vector<1x128xf32>
    %5 = vector.broadcast %4 : vector<1x128xf32> to vector<8x128xf32>
    %6 = arith.addf %3, %5 : vector<8x128xf32>
    %cst_5 = arith.constant 0.000000e+00 : f32
    %7 = vector.broadcast %cst_5 : f32 to vector<8x128xf32>
    %8 = arith.maximumf %6, %7 : vector<8x128xf32>
    %9 = arith.truncf %8 : vector<8x128xf32> to vector<8x128xbf16>
    %c0_6 = arith.constant 0 : index
    %c0_7 = arith.constant 0 : index
    %10 = vector.load %arg3[%c0_6, %c0_7] : memref<128x128xbf16, #tpu.memory_space<vmem>>, vector<128x128xbf16>
    %cst_8 = arith.constant dense<0.000000e+00> : vector<8x128xf32>
    %11 = tpu.matmul %9, %10, %cst_8 {dimension_numbers = #tpu.dot_dimension_numbers<[1], [0], [0], [1], [0, 0, 1, 1], [], []>} : vector<8x128xbf16>, vector<128x128xbf16>, vector<8x128xf32> -> vector<8x128xf32>
    %c1 = arith.constant 1 : index
    %c0_9 = arith.constant 0 : index
    %12 = vector.load %arg5[%c1, %c0_9] : memref<3x128xf32, #tpu.memory_space<vmem>>, vector<1x128xf32>
    %13 = vector.broadcast %12 : vector<1x128xf32> to vector<8x128xf32>
    %14 = arith.addf %11, %13 : vector<8x128xf32>
    %cst_10 = arith.constant 0.000000e+00 : f32
    %15 = vector.broadcast %cst_10 : f32 to vector<8x128xf32>
    %16 = arith.maximumf %14, %15 : vector<8x128xf32>
    %17 = arith.truncf %16 : vector<8x128xf32> to vector<8x128xbf16>
    %c0_11 = arith.constant 0 : index
    %c0_12 = arith.constant 0 : index
    %18 = vector.load %arg4[%c0_11, %c0_12] : memref<128x16xbf16, #tpu.memory_space<vmem>>, vector<128x16xbf16>
    %cst_13 = arith.constant dense<0.000000e+00> : vector<8x16xf32>
    %19 = tpu.matmul %17, %18, %cst_13 {dimension_numbers = #tpu.dot_dimension_numbers<[1], [0], [0], [1], [0, 0, 1, 1], [], []>} : vector<8x128xbf16>, vector<128x16xbf16>, vector<8x16xf32> -> vector<8x16xf32>
    %c2 = arith.constant 2 : index
    %c0_14 = arith.constant 0 : index
    %20 = vector.load %arg5[%c2, %c0_14] : memref<3x128xf32, #tpu.memory_space<vmem>>, vector<1x16xf32>
    %21 = vector.broadcast %20 : vector<1x16xf32> to vector<8x16xf32>
    %22 = arith.addf %19, %21 : vector<8x16xf32>
    %c0_15 = arith.constant 0 : index
    %c0_16 = arith.constant 0 : index
    %23 = vector.load %arg6[%c0_15, %c0_16] : memref<8x16xf32, #tpu.memory_space<vmem>>, vector<8x16xf32>
    tpu.vector_store %arg6[%c0_15, %c0_16], %22 {strides = array<i32>} : memref<8x16xf32, #tpu.memory_space<vmem>>, vector<8x16xf32>,
    return
  }
  func.func @transform_0(%arg0: i32) -> (i32, i32) {
    %c0_i32 = arith.constant 0 : i32
    %c0_i32_0 = arith.constant 0 : i32
    return %arg0, %c0_i32 : i32, i32
  }
  func.func @transform_1(%arg0: i32) -> (i32, i32) {
    %c0_i32 = arith.constant 0 : i32
    %c0_i32_0 = arith.constant 0 : i32
    %c0_i32_1 = arith.constant 0 : i32
    return %c0_i32, %c0_i32_0 : i32, i32
  }
  func.func @transform_2(%arg0: i32) -> (i32, i32) {
    %c0_i32 = arith.constant 0 : i32
    %c0_i32_0 = arith.constant 0 : i32
    %c0_i32_1 = arith.constant 0 : i32
    return %c0_i32, %c0_i32_0 : i32, i32
  }
  func.func @transform_3(%arg0: i32) -> (i32, i32) {
    %c0_i32 = arith.constant 0 : i32
    %c0_i32_0 = arith.constant 0 : i32
    %c0_i32_1 = arith.constant 0 : i32
    return %c0_i32, %c0_i32_0 : i32, i32
  }
  func.func @transform_4(%arg0: i32) -> (i32, i32) {
    %c0_i32 = arith.constant 0 : i32
    %c0_i32_0 = arith.constant 0 : i32
    %c0_i32_1 = arith.constant 0 : i32
    return %c0_i32, %c0_i32_0 : i32, i32
  }
  func.func @transform_5(%arg0: i32) -> (i32, i32) {
    %c0_i32 = arith.constant 0 : i32
    %c0_i32_0 = arith.constant 0 : i32
    return %arg0, %c0_i32 : i32, i32
  }
}

</mosaic_0001>

<llo_original>
// kernel: tpu_custom_call.1
$region0: #{tpu_custom_call.1}
  #allocation0 [shape = 'u32[]', space=smem, size = 0x4, offset = 0x4, fixed_abs, tag = 'smem constant byte address 0x4 - core index']
  #allocation1 [shape = 'u32[144,128]{1,0:T(1,128)}', space=vmem, size = 0x12000, scoped, tag = 'internal scratch']
  %s0 = inlined_call_operand.vmem [shape: f32[8,32], index: 0, kind: input, shape index: {}]
  %s1 = inlined_call_operand.hbm [shape: bf16[32,128], index: 1, kind: input, shape index: {}]
  %s2 = inlined_call_operand.vmem [shape: bf16[128,128], index: 2, kind: input, shape index: {}]
  %s3 = inlined_call_operand.vmem [shape: bf16[128,16], index: 3, kind: input, shape index: {}]
  %s4 = inlined_call_operand.vmem [shape: f32[3,128], index: 4, kind: input, shape index: {}]
  %s5 = inlined_call_operand.hbm [shape: f32[8,16], index: 5, kind: output, shape index: {}]
  %s6 = sld [smem:[#allocation0]]
  $region34: #{tpu_custom_call.1} parent=0
    _
  %s8 = ssub.s32 1, %s6
  %s9 = scalar_select 0, %s8, %s6
  $region1: #{tpu_custom_call.1} parent=0
    #allocation2 [shape = 'u8[8192]{0}', space=vmem, size = 0x2000, scoped, tag = 'input window, operand 1, single buffered']
    #allocation3 [shape = 's32[1]{0}', space=sflag, size = 0x4, scoped, tag = 'scoped memory for tpu_custom_call.1']
    #allocation4 [shape = 's32[1]{0}', space=sflag, size = 0x4, scoped, tag = 'scoped memory for tpu_custom_call.1']
    #allocation5 [shape = 'u8[4096]{0}', space=vmem, size = 0x1000, scoped, tag = 'output window, operand 0, single buffered']
    %10 = vsyncpa [#allocation3], 0
    %11 = vsyncpa [#allocation4], 0
    // Predicated region
    $region2: #{tpu_custom_call.1} parent=1 // pred_check
      _
    $region3: #{tpu_custom_call.1} parent=1 // pred_check_branch
      %13 = sbr.rel (0) target = $region5
    $region4: #{tpu_custom_call.1} parent=1 // pred_region
      _
    $region5: #{tpu_custom_call.1} parent=1 // pred_fallthru
      _
    // Predicated region
    $region6: #{tpu_custom_call.1} parent=1 // pred_check
      _
    $region7: #{tpu_custom_call.1} parent=1 // pred_check_branch
      %15 = sbr.rel (0) target = $region9
    $region8: #{tpu_custom_call.1} parent=1 // pred_region
      %s17 = ssub.s32 256, 256
      %18 = vsyncadd [#allocation3], %s17
      %s19 = sshll.u32 [#allocation2], 4
      %s20 = int_to_ptr.vmem [resolvable:$true] %s19
      %25 = dma.hbm_to_vmem [thread:$0]  %s1, 256, %s20, [#allocation3], 64, 64, 4
    $region9: #{tpu_custom_call.1} parent=1 // pred_fallthru
      _
    // Predicated region
    $region10: #{tpu_custom_call.1} parent=1 // pred_check
      _
    $region11: #{tpu_custom_call.1} parent=1 // pred_check_branch
      %27 = sbr.rel (0) target = $region13
    $region12: #{tpu_custom_call.1} parent=1 // pred_region
      _
    $region13: #{tpu_custom_call.1} parent=1 // pred_fallthru
      _
    // Predicated region
    $region14: #{tpu_custom_call.1} parent=1 // pred_check
      _
    $region15: #{tpu_custom_call.1} parent=1 // pred_check_branch
      %29 = sbr.rel (0) target = $region17
    $region16: #{tpu_custom_call.1} parent=1 // pred_region
      _
    $region17: #{tpu_custom_call.1} parent=1 // pred_fallthru
      _
    // Predicated region
    $region18: #{tpu_custom_call.1} parent=1 // pred_check
      _
    $region19: #{tpu_custom_call.1} parent=1 // pred_check_branch
      %31 = sbr.rel (0) target = $region21
    $region20: #{tpu_custom_call.1} parent=1 // pred_region
      _
    $region21: #{tpu_custom_call.1} parent=1 // pred_fallthru
      _
    // Predicated region
    $region22: #{tpu_custom_call.1} parent=1 // pred_check
      _
    $region23: #{tpu_custom_call.1} parent=1 // pred_check_branch
      %33 = sbr.rel (0) target = $region25
    $region24: #{tpu_custom_call.1} parent=1 // pred_region
      %34 = dma.done [#allocation3], 256
    $region25: #{tpu_custom_call.1} parent=1 // pred_fallthru
      _
    %v36 = vld [vmem:[%s0] sm:$0xff]
    %v37 = vpack.c.bf16 %v36, %v36
    %v38 = vld [vmem:[#allocation2] sm:$0xf]
    %v39 = vld [vmem:[#allocation2 + $0x4] sm:$0xf]
    %v40 = vld [vmem:[#allocation2 + $0x8] sm:$0xf]
    %v41 = vld [vmem:[#allocation2 + $0xc] sm:$0xf]
    %v42 = vld [vmem:[%s4] sm:$0x1]
    %v43 = vlaneseq
    %v44 = vshrl.u32 %v43, 7
    %v45 = vsub.s32 0, %v44
    %v46 = vrot.slane %v42, %v45
    %v51 = vunpack.c.l.b16 %v38
    %v52 = vunpack.c.l.b16 %v39
    %v53 = vunpack.c.l.b16 %v40
    %v54 = vunpack.c.l.b16 %v41
    %v55 = vpack.c.b16 %v52, %v51
    %v56 = vpack.c.b16 %v54, %v53
    %vm59 = vcmask 261120
    %v61 = vsel %vm59, %v37, 0
    %63 = vmatprep.subr.bf16.mxu0 0
    %64 = vmatpush1.bf16.msra.mxu0 0
    %65 = vmatprep.subr.bf16.mxu0 0
    %66 = vmatpush1.bf16.msra.mxu0 0
    %67 = vmatprep.subr.bf16.mxu0 0
    %68 = vmatpush1.bf16.msra.mxu0 0
    %69 = vmatprep.subr.bf16.mxu0 0
    %70 = vmatpush1.bf16.msra.mxu0 0
    %71 = vmatprep.subr.bf16.mxu0 0
    %72 = vmatpush1.bf16.msra.mxu0 0
    %73 = vmatprep.subr.bf16.mxu0 0
    %74 = vmatpush1.bf16.msra.mxu0 0
    %75 = vmatprep.subr.bf16.mxu0 0
    %76 = vmatpush1.bf16.msra.mxu0 %v56
    %77 = vmatprep.subr.bf16.mxu0 0
    %78 = vmatpush1.bf16.msra.mxu0 %v55
    %79 = vmatprep.subr.bf16.mxu0 0
    %80 = vmatpush2.bf16.msra.mxu0 0
    %81 = vmatprep.subr.bf16.mxu0 0
    %82 = vmatpush2.bf16.msra.mxu0 0
    %83 = vmatprep.subr.bf16.mxu0 0
    %84 = vmatpush2.bf16.msra.mxu0 0
    %85 = vmatprep.subr.bf16.mxu0 0
    %86 = vmatpush2.bf16.msra.mxu0 0
    %87 = vmatprep.subr.bf16.mxu0 0
    %88 = vmatpush2.bf16.msra.mxu0 0
    %89 = vmatprep.subr.bf16.mxu0 0
    %90 = vmatpush2.bf16.msra.mxu0 0
    %91 = vmatprep.subr.bf16.mxu0 0
    %92 = vmatpush2.bf16.msra.mxu0 0
    %93 = vmatprep.subr.bf16.mxu0 0
    %94 = vmatpush2.bf16.msra.mxu0 0
    %95 = vmatprep.mubr.bf16.mxu0 0
    %96 = vmatmul.mubr.bf16.gmra.mxu0 %v61
    %v97 = vpop.f32.mrf.mxu0
    %v98 = vadd.f32 %v46, %v97
    %v99 = vpop.f32.mrf.mxu0
    %v100 = vpop.f32.mrf.mxu0
    %v101 = vpop.f32.mrf.mxu0
    %102 = vdwg.mxu0
    %v103 = vmax.f32 %v98, 0.0
    %v104 = vpack.c.bf16 %v103, %v103
    %v105 = vld [vmem:[%s2] sm:$0xf]
    %v106 = vld [vmem:[%s2 + $0x4] sm:$0xf]
    %v107 = vld [vmem:[%s2 + $0x8] sm:$0xf]
    %v108 = vld [vmem:[%s2 + $0xc] sm:$0xf]
    %v109 = vld [vmem:[%s2 + $0x10] sm:$0xf]
    %v110 = vld [vmem:[%s2 + $0x14] sm:$0xf]
    %v111 = vld [vmem:[%s2 + $0x18] sm:$0xf]
    %v112 = vld [vmem:[%s2 + $0x1c] sm:$0xf]
    %v113 = vld [vmem:[%s2 + $0x20] sm:$0xf]
    %v114 = vld [vmem:[%s2 + $0x24] sm:$0xf]
    %v115 = vld [vmem:[%s2 + $0x28] sm:$0xf]
    %v116 = vld [vmem:[%s2 + $0x2c] sm:$0xf]
    %v117 = vld [vmem:[%s2 + $0x30] sm:$0xf]
    %v118 = vld [vmem:[%s2 + $0x34] sm:$0xf]
    %v119 = vld [vmem:[%s2 + $0x38] sm:$0xf]
    %v120 = vld [vmem:[%s2 + $0x3c] sm:$0xf]
    %v121 = vld [vmem:[%s4 + $0x1] sm:$0x1]
    %v122 = vlaneseq
    %v123 = vshrl.u32 %v122, 7
    %v124 = vsub.s32 0, %v123
    %v125 = vrot.slane %v121, %v124
    %v142 = vunpack.c.l.b16 %v105
    %v143 = vunpack.c.l.b16 %v106
    %v144 = vunpack.c.l.b16 %v107
    %v145 = vunpack.c.l.b16 %v108
    %v146 = vunpack.c.l.b16 %v109
    %v147 = vunpack.c.l.b16 %v110
    %v148 = vunpack.c.l.b16 %v111
    %v149 = vunpack.c.l.b16 %v112
    %v150 = vunpack.c.l.b16 %v113
    %v151 = vunpack.c.l.b16 %v114
    %v152 = vunpack.c.l.b16 %v115
    %v153 = vunpack.c.l.b16 %v116
    %v154 = vunpack.c.l.b16 %v117
    %v155 = vunpack.c.l.b16 %v118
    %v156 = vunpack.c.l.b16 %v119
    %v157 = vunpack.c.l.b16 %v120
    %v158 = vpack.c.b16 %v143, %v142
    %v159 = vpack.c.b16 %v145, %v144
    %v160 = vpack.c.b16 %v147, %v146
    %v161 = vpack.c.b16 %v149, %v148
    %v162 = vpack.c.b16 %v151, %v150
    %v163 = vpack.c.b16 %v153, %v152
    %v164 = vpack.c.b16 %v155, %v154
    %v165 = vpack.c.b16 %v157, %v156
    %174 = vmatprep.subr.bf16.mxu0 0
    %175 = vmatpush1.bf16.msra.mxu0 %v165
    %176 = vmatprep.subr.bf16.mxu0 0
    %177 = vmatpush1.bf16.msra.mxu0 %v164
    %178 = vmatprep.subr.bf16.mxu0 0
    %179 = vmatpush1.bf16.msra.mxu0 %v163
    %180 = vmatprep.subr.bf16.mxu0 0
    %181 = vmatpush1.bf16.msra.mxu0 %v162
    %182 = vmatprep.subr.bf16.mxu0 0
    %183 = vmatpush1.bf16.msra.mxu0 %v161
    %184 = vmatprep.subr.bf16.mxu0 0
    %185 = vmatpush1.bf16.msra.mxu0 %v160
    %186 = vmatprep.subr.bf16.mxu0 0
    %187 = vmatpush1.bf16.msra.mxu0 %v159
    %188 = vmatprep.subr.bf16.mxu0 0
    %189 = vmatpush1.bf16.msra.mxu0 %v158
    %190 = vmatprep.subr.bf16.mxu0 0
    %191 = vmatpush2.bf16.msra.mxu0 0
    %192 = vmatprep.subr.bf16.mxu0 0
    %193 = vmatpush2.bf16.msra.mxu0 0
    %194 = vmatprep.subr.bf16.mxu0 0
    %195 = vmatpush2.bf16.msra.mxu0 0
    %196 = vmatprep.subr.bf16.mxu0 0
    %197 = vmatpush2.bf16.msra.mxu0 0
    %198 = vmatprep.subr.bf16.mxu0 0
    %199 = vmatpush2.bf16.msra.mxu0 0
    %200 = vmatprep.subr.bf16.mxu0 0
    %201 = vmatpush2.bf16.msra.mxu0 0
    %202 = vmatprep.subr.bf16.mxu0 0
    %203 = vmatpush2.bf16.msra.mxu0 0
    %204 = vmatprep.subr.bf16.mxu0 0
    %205 = vmatpush2.bf16.msra.mxu0 0
    %206 = vmatprep.mubr.bf16.mxu0 0
    %207 = vmatmul.mubr.bf16.gmra.mxu0 %v104
    %v208 = vpop.f32.mrf.mxu0
    %v209 = vadd.f32 %v125, %v208
    %v210 = vpop.f32.mrf.mxu0
    %v211 = vpop.f32.mrf.mxu0
    %v212 = vpop.f32.mrf.mxu0
    %213 = vdwg.mxu0
    %v214 = vmax.f32 %v209, 0.0
    %v215 = vpack.c.bf16 %v214, %v214
    %v216 = vld [vmem:[%s3] sm:$0xf]
    %v217 = vld [vmem:[%s3 + $0x4] sm:$0xf]
    %v218 = vld [vmem:[%s3 + $0x8] sm:$0xf]
    %v219 = vld [vmem:[%s3 + $0xc] sm:$0xf]
    %v220 = vld [vmem:[%s3 + $0x10] sm:$0xf]
    %v221 = vld [vmem:[%s3 + $0x14] sm:$0xf]
    %v222 = vld [vmem:[%s3 + $0x18] sm:$0xf]
    %v223 = vld [vmem:[%s3 + $0x1c] sm:$0xf]
    %v224 = vld [vmem:[%s3 + $0x20] sm:$0xf]
    %v225 = vld [vmem:[%s3 + $0x24] sm:$0xf]
    %v226 = vld [vmem:[%s3 + $0x28] sm:$0xf]
    %v227 = vld [vmem:[%s3 + $0x2c] sm:$0xf]
    %v228 = vld [vmem:[%s3 + $0x30] sm:$0xf]
    %v229 = vld [vmem:[%s3 + $0x34] sm:$0xf]
    %v230 = vld [vmem:[%s3 + $0x38] sm:$0xf]
    %v231 = vld [vmem:[%s3 + $0x3c] sm:$0xf]
    %v232 = vld [vmem:[%s4 + $0x2] sm:$0x1]
    %v233 = vlaneseq
    %v234 = vshrl.u32 %v233, 7
    %v235 = vsub.s32 0, %v234
    %v236 = vrot.slane %v232, %v235
    %v253 = vunpack.c.l.b16 %v216
    %v254 = vunpack.c.l.b16 %v217
    %v255 = vunpack.c.l.b16 %v218
    %v256 = vunpack.c.l.b16 %v219
    %v257 = vunpack.c.l.b16 %v220
    %v258 = vunpack.c.l.b16 %v221
    %v259 = vunpack.c.l.b16 %v222
    %v260 = vunpack.c.l.b16 %v223
    %v261 = vunpack.c.l.b16 %v224
    %v262 = vunpack.c.l.b16 %v225
    %v263 = vunpack.c.l.b16 %v226
    %v264 = vunpack.c.l.b16 %v227
    %v265 = vunpack.c.l.b16 %v228
    %v266 = vunpack.c.l.b16 %v229
    %v267 = vunpack.c.l.b16 %v230
    %v268 = vunpack.c.l.b16 %v231
    %v269 = vpack.c.b16 %v254, %v253
    %v270 = vpack.c.b16 %v256, %v255
    %v271 = vpack.c.b16 %v258, %v257
    %v272 = vpack.c.b16 %v260, %v259
    %v273 = vpack.c.b16 %v262, %v261
    %v274 = vpack.c.b16 %v264, %v263
    %v275 = vpack.c.b16 %v266, %v265
    %v276 = vpack.c.b16 %v268, %v267
    %285 = vmatprep.subr.bf16.mxu0 0
    %286 = vmatpush1.bf16.msra.mxu0 %v276
    %287 = vmatprep.subr.bf16.mxu0 0
    %288 = vmatpush1.bf16.msra.mxu0 %v275
    %289 = vmatprep.subr.bf16.mxu0 0
    %290 = vmatpush1.bf16.msra.mxu0 %v274
    %291 = vmatprep.subr.bf16.mxu0 0
    %292 = vmatpush1.bf16.msra.mxu0 %v273
    %293 = vmatprep.subr.bf16.mxu0 0
    %294 = vmatpush1.bf16.msra.mxu0 %v272
    %295 = vmatprep.subr.bf16.mxu0 0
    %296 = vmatpush1.bf16.msra.mxu0 %v271
    %297 = vmatprep.subr.bf16.mxu0 0
    %298 = vmatpush1.bf16.msra.mxu0 %v270
    %299 = vmatprep.subr.bf16.mxu0 0
    %300 = vmatpush1.bf16.msra.mxu0 %v269
    %301 = vmatprep.subr.bf16.mxu0 0
    %302 = vmatpush2.bf16.msra.mxu0 0
    %303 = vmatprep.subr.bf16.mxu0 0
    %304 = vmatpush2.bf16.msra.mxu0 0
    %305 = vmatprep.subr.bf16.mxu0 0
    %306 = vmatpush2.bf16.msra.mxu0 0
    %307 = vmatprep.subr.bf16.mxu0 0
    %308 = vmatpush2.bf16.msra.mxu0 0
    %309 = vmatprep.subr.bf16.mxu0 0
    %310 = vmatpush2.bf16.msra.mxu0 0
    %311 = vmatprep.subr.bf16.mxu0 0
    %312 = vmatpush2.bf16.msra.mxu0 0
    %313 = vmatprep.subr.bf16.mxu0 0
    %314 = vmatpush2.bf16.msra.mxu0 0
    %315 = vmatprep.subr.bf16.mxu0 0
    %316 = vmatpush2.bf16.msra.mxu0 0
    %317 = vmatprep.mubr.bf16.mxu0 0
    %318 = vmatmul.mubr.bf16.gmra.mxu0 %v215
    %v319 = vpop.f32.mrf.mxu0
    %v320 = vadd.f32 %v236, %v319
    %v321 = vpop.f32.mrf.mxu0
    %v322 = vpop.f32.mrf.mxu0
    %v323 = vpop.f32.mrf.mxu0
    %324 = vdwg.mxu0
    %vm325 = vcmask 130048
    %326 = vst.msk [vmem:[#allocation5] sm:$0xff] %vm325, %v320
    // Predicated region
    $region26: #{tpu_custom_call.1} parent=1 // pred_check
      _
    $region27: #{tpu_custom_call.1} parent=1 // pred_check_branch
      %328 = sbr.rel (0) target = $region29
    $region28: #{tpu_custom_call.1} parent=1 // pred_region
      %s330 = ssub.s32 128, 128
      %331 = vsyncadd [#allocation4], %s330
      %s333 = sshll.u32 [#allocation5], 4
      %s334 = int_to_ptr.vmem [resolvable:$true] %s333
      %336 = dma.vmem_to_hbm [thread:$0]  %s334, 128, %s5, [#allocation4]
    $region29: #{tpu_custom_call.1} parent=1 // pred_fallthru
      _
    // Predicated region
    $region30: #{tpu_custom_call.1} parent=1 // pred_check
      _
    $region31: #{tpu_custom_call.1} parent=1 // pred_check_branch
      %338 = sbr.rel (0) target = $region33
    $region32: #{tpu_custom_call.1} parent=1 // pred_region
      %339 = dma.done [#allocation4], 128
    $region33: #{tpu_custom_call.1} parent=1 // pred_fallthru
      _
    %340 = vsyncpa [#allocation3], 1
    %341 = vsyncpa [#allocation4], 1

</llo_original>
